<compile_context>
chip_gen: v6e
topology: v6e:2x2x1
jax: 0.10.0
libtpu: 0.0.40
codegen_flags: <defaults>
</compile_context>

<pallas_src>
import functools
import math

import jax
import jax.numpy as jnp
from jax.experimental import pallas as pl
from jax.experimental.pallas import tpu as pltpu

_LOG_2PI = math.log(2.0 * math.pi)
_VMEM_LIMIT = 32 * 1024 * 1024  # explicit scoped-VMEM limit, safe on v5e/v6e/v7x


# ----------------------------------------------------------------------------
# tiling helpers
# ----------------------------------------------------------------------------
def _pick_batch_tile(batch: int) -> int:
    """Batch tile for the forward grid.

    Big tiles (up to 4096 rows) amortize the ~0.35 us/grid-step overhead and
    fill the MXU M dimension; at in_size<=64 even a 4096-row tile is <1 MiB per
    buffer, far under every generation's scoped VMEM.  When the batch is large
    we keep >=2 grid steps so the "parallel" batch axis can be split across
    v7x's two TensorCores.  Only exact divisors are returned (no partial
    blocks), which the fused-loss accumulator relies on.
    """
    if batch <= 256:
        return batch  # single full block (block_shape == array dims is allowed)
    for tb in (4096, 2048, 1024, 512, 256):
        if batch % tb == 0 and batch // tb >= 2:
            return tb
    return batch


def _pack_params(p):
    """Fuse the two heads into single matmuls (done once per param set).

    wh1 = [wm1 | wl1]            (h1, 2*h2)
    wh2 = [[wm2, 0], [0, wl2]]   (2*h2, 2*out)  block-diagonal
    so   relu(z) @ wh1 -> [hm | hl],  relu(.) @ wh2 -> [mu | logvar].
    """
    h2 = p["wm1"].shape[1]
    out = p["wm2"].shape[1]
    dt = p["wm2"].dtype
    wh1 = jnp.concatenate([p["wm1"], p["wl1"]], axis=1)
    bh1 = jnp.concatenate([p["bm1"], p["bl1"]], axis=1)
    z = jnp.zeros((h2, out), dt)
    wh2 = jnp.concatenate(
        [jnp.concatenate([p["wm2"], z], axis=1),
         jnp.concatenate([z, p["wl2"]], axis=1)], axis=0)
    bh2 = jnp.concatenate([p["bm2"], p["bl2"]], axis=1)
    return (p["w0"], p["b0"], p["w1"], p["b1"], wh1, bh1, wh2, bh2)


# ----------------------------------------------------------------------------
# shared MLP body (operates on refs; native-dtype MXU feeds, f32 accumulation)
# ----------------------------------------------------------------------------
def _mlp_slab_f32(x_ref, w0, b0, w1, b1, wh1, bh1, wh2, bh2):
    f32 = jnp.float32
    dt = w0.dtype                      # MXU feed dtype (f32 or bf16)
    x = x_ref[...].astype(dt)          # no-op when dtypes already match

    # base_network: Linear -> ReLU -> Linear   (head ReLU fused into zr)
    h = jnp.dot(x, w0[...], preferred_element_type=f32)
    h = jnp.maximum(h + b0[...].astype(f32), 0.0).astype(dt)
    z = jnp.dot(h, w1[...], preferred_element_type=f32)
    zr = jnp.maximum(z + b1[...].astype(f32), 0.0).astype(dt)

    # fused mu/logvar heads: Linear -> ReLU -> Linear (block-diag second layer)
    hh = jnp.dot(zr, wh1[...], preferred_element_type=f32)
    hh = jnp.maximum(hh + bh1[...].astype(f32), 0.0).astype(dt)
    slab = jnp.dot(hh, wh2[...], preferred_element_type=f32) + bh2[...].astype(f32)
    return slab                        # f32 (tb, 2*out):  [:, :out]=mu, [:, out:]=logvar


# ----------------------------------------------------------------------------
# kernel 1: forward only (parallel batch grid, slab output)
# ----------------------------------------------------------------------------
def _ghn_forward_kernel(x_ref, w0, b0, w1, b1, wh1, bh1, wh2, bh2, slab_ref):
    slab = _mlp_slab_f32(x_ref, w0, b0, w1, b1, wh1, bh1, wh2, bh2)
    slab_ref[...] = slab.astype(slab_ref.dtype)


# ----------------------------------------------------------------------------
# kernel 2: forward + Gaussian-NLL loss fused (mu/logvar never round-trip HBM
# for the loss; grid axis must stay "arbitrary" -- accumulator carries)
# ----------------------------------------------------------------------------
def _ghn_forward_loss_kernel(x_ref, y_ref, w0, b0, w1, b1, wh1, bh1, wh2, bh2,
                             slab_ref, loss_ref, acc_ref, *,
                             out_size: int, inv_denom: float):
    i = pl.program_id(0)

    @pl.when(i == 0)
    def _():
        acc_ref[...] = jnp.zeros_like(acc_ref)

    slab = _mlp_slab_f32(x_ref, w0, b0, w1, b1, wh1, bh1, wh2, bh2)
    slab_ref[...] = slab.astype(slab_ref.dtype)

    mu = slab[:, :out_size]
    lv = slab[:, out_size:]
    y = y_ref[...].astype(jnp.float32)
    d = y - mu
    # 0.5 and log(2*pi) hoisted to the epilogue; exp goes to the EUP slot.
    t = lv + d * d * jnp.exp(-lv)                          # (tb, out)

    acc_rows = acc_ref.shape[0]
    acc_ref[...] += t.reshape(-1, acc_rows, out_size).sum(axis=0)   # VPU adds

    @pl.when(i == pl.num_programs(0) - 1)
    def _():
        total = jnp.sum(acc_ref[...])                      # single XLU reduce
        loss_ref[0, 0] = 0.5 * (total * inv_denom + _LOG_2PI)


# ----------------------------------------------------------------------------
# kernel 3: standalone lane-dense Gaussian NLL (module-parity loss API)
# ----------------------------------------------------------------------------
def _nll_kernel(y_ref, mu_ref, lv_ref, out_ref, acc_ref, *, inv_denom: float):
    i = pl.program_id(0)

    @pl.when(i == 0)
    def _():
        acc_ref[...] = jnp.zeros_like(acc_ref)

    y = y_ref[...].astype(jnp.float32)
    mu = mu_ref[...].astype(jnp.float32)
    lv = lv_ref[...].astype(jnp.float32)
    d = y - mu
    t = lv + d * d * jnp.exp(-lv)                          # (tr, 128) lane-dense
    acc_ref[...] += t.reshape(-1, acc_ref.shape[0], acc_ref.shape[1]).sum(axis=0)

    @pl.when(i == pl.num_programs(0) - 1)
    def _():
        out_ref[0, 0] = 0.5 * (jnp.sum(acc_ref[...]) * inv_denom + _LOG_2PI)


# ----------------------------------------------------------------------------
# wrappers
# ----------------------------------------------------------------------------
def _forward_call(x, packed, labels=None, out_size=None):
    batch, in_size = x.shape
    out2 = packed[6].shape[1]            # 2 * output_size
    tb = _pick_batch_tile(batch)
    grid = (batch // tb,)

    def row_spec(cols):                  # batch-tiled activations / outputs
        return pl.BlockSpec((tb, cols), lambda i: (i, 0))

    def full_spec(a):                    # weights/biases resident across grid steps
        return pl.BlockSpec(a.shape, lambda i: (0, 0))

    weight_specs = [full_spec(a) for a in packed]

    if labels is None:
        return pl.pallas_call(
            _ghn_forward_kernel,
            out_shape=jax.ShapeDtypeStruct((batch, out2), x.dtype),
            grid=grid,
            in_specs=[row_spec(in_size)] + weight_specs,
            out_specs=row_spec(out2),
            compiler_params=pltpu.CompilerParams(
                dimension_semantics=("parallel",),
                vmem_limit_bytes=_VMEM_LIMIT),
        )(x, *packed)

    acc_rows = 8 if tb % 8 == 0 else tb
    kern = functools.partial(_ghn_forward_loss_kernel, out_size=out_size,
                             inv_denom=1.0 / float(batch * out_size))
    slab, loss = pl.pallas_call(
        kern,
        out_shape=(jax.ShapeDtypeStruct((batch, out2), x.dtype),
                   jax.ShapeDtypeStruct((1, 1), jnp.float32)),
        grid=grid,
        in_specs=[row_spec(in_size), row_spec(out_size)] + weight_specs,
        out_specs=(row_spec(out2),
                   pl.BlockSpec(memory_space=pltpu.MemorySpace.SMEM)),
        scratch_shapes=[pltpu.VMEM((acc_rows, out_size), jnp.float32)],
        compiler_params=pltpu.CompilerParams(
            # NOTE: must stay "arbitrary" -- the NLL accumulator carries across steps.
            dimension_semantics=("arbitrary",),
            vmem_limit_bytes=_VMEM_LIMIT),
    )(x, labels, *packed)
    return slab, loss[0, 0]


def gaussian_history_forward_slab(x, params):
    """x: (B, in) -> (B, 2*out) slab, [:, :out]=mu, [:, out:]=logvar (no stack pass)."""
    return _forward_call(x, _pack_params(params))


def gaussian_history_forward(x, params):
    """Module-parity output: (B, out, 2) = cat([mu.unsqueeze(2), logvar.unsqueeze(2)], 2).

    The final stack is wrapper-side layout plumbing for API parity only; hot
    loops that only need the loss should use gaussian_history_forward_and_loss.
    """
    slab = gaussian_history_forward_slab(x, params)
    out = slab.shape[1] // 2
    return jnp.stack([slab[:, :out], slab[:, out:]], axis=2)


def gaussian_history_forward_and_loss(x, labels, params):
    """Fused forward + Gaussian NLL.  Returns ((B, 2*out) slab, scalar loss)."""
    packed = _pack_params(params)
    out = packed[6].shape[1] // 2
    assert labels.shape == (x.shape[0], out), (labels.shape, x.shape, out)
    return _forward_call(x, packed, labels=labels, out_size=out)


def likelihood_loss(labels, predictions):
    """LikelihoodLossFunction: labels (B,F); predictions (B,F,2). Scalar f32 loss."""
    batch, flen, two = predictions.shape
    assert two == 2 and labels.shape == (batch, flen)
    mu = predictions[:, :, 0]
    lv = predictions[:, :, 1]
    return _nll_pallas(labels, mu, lv, denom=batch * flen)


def _nll_pallas(y, mu, lv, denom):
    f32 = jnp.float32
    y = y.astype(f32).reshape(-1)
    mu = mu.astype(f32).reshape(-1)
    lv = lv.astype(f32).reshape(-1)
    total = y.shape[0]
    # Flatten + zero-pad to a (rows, 128) lane-dense layout (rows % 8 == 0).
    # Zero padding contributes exactly 0 to sum(lv + (y-mu)^2 * exp(-lv)).
    pad = (-total) % (8 * 128)
    if pad:
        y = jnp.pad(y, (0, pad))
        mu = jnp.pad(mu, (0, pad))
        lv = jnp.pad(lv, (0, pad))
    rows = (total + pad) // 128
    y2 = y.reshape(rows, 128)
    m2 = mu.reshape(rows, 128)
    l2 = lv.reshape(rows, 128)

    tr = rows
    if rows > 4096:                      # tile the row axis only for big inputs
        tr = 8
        for cand in (4096, 2048, 1024, 512, 256):
            if rows % cand == 0:
                tr = cand
                break
    grid = (rows // tr,)

    out = pl.pallas_call(
        functools.partial(_nll_kernel, inv_denom=1.0 / float(denom)),
        out_shape=jax.ShapeDtypeStruct((1, 1), f32),
        grid=grid,
        in_specs=[pl.BlockSpec((tr, 128), lambda i: (i, 0))] * 3,
        out_specs=pl.BlockSpec(memory_space=pltpu.MemorySpace.SMEM),
        scratch_shapes=[pltpu.VMEM((8, 128), f32)],
        compiler_params=pltpu.CompilerParams(
            dimension_semantics=("arbitrary",),   # accumulator carries across steps
            vmem_limit_bytes=_VMEM_LIMIT),
    )(y2, m2, l2)
    return out[0, 0]


# ----------------------------------------------------------------------------
# pure-JAX references
# ----------------------------------------------------------------------------
def _forward_reference(x, p):
    h = jax.nn.relu(x @ p["w0"] + p["b0"])
    z = h @ p["w1"] + p["b1"]
    zr = jax.nn.relu(z)
    hm = jax.nn.relu(zr @ p["wm1"] + p["bm1"])
    mu = hm @ p["wm2"] + p["bm2"]
    hl = jax.nn.relu(zr @ p["wl1"] + p["bl1"])
    lv = hl @ p["wl2"] + p["bl2"]
    return jnp.stack([mu, lv], axis=2)


def _loss_reference(labels, predictions):
    mu = predictions[:, :, 0]
    lv = predictions[:, :, 1]
    nll = 0.5 * (_LOG_2PI + lv + (labels - mu) ** 2 * jnp.exp(-lv))
    return jnp.mean(nll)


# ----------------------------------------------------------------------------
# params
# ----------------------------------------------------------------------------
def init_params(key, input_size, hidden_size, output_size, dtype=jnp.float32):
    h0, h1, h2 = hidden_size
    dims = [("w0", input_size, h0), ("w1", h0, h1),
            ("wm1", h1, h2), ("wm2", h2, output_size),
            ("wl1", h1, h2), ("wl2", h2, output_size)]
    params = {}
    keys = jax.random.split(key, 2 * len(dims))
    for idx, (name, din, dout) in enumerate(dims):
        scale = float(din) ** -0.5
        params[name] = jax.random.normal(keys[2 * idx], (din, dout), dtype) * scale
        params["b" + name[1:]] = (
            jax.random.normal(keys[2 * idx + 1], (1, dout), dtype) * 0.1)
    return params


# ----------------------------------------------------------------------------
if __name__ == "__main__":
    input_size = 32
    hidden_size = (64, 64, 32)
    output_size = 16          # forecast_length

    key = jax.random.PRNGKey(0)
    kp, kx, ky = jax.random.split(key, 3)
    params = init_params(kp, input_size, hidden_size, output_size)

    for batch in (8, 512):    # single-block path and multi-step (2 grid steps) path
        kxb, kyb = jax.random.split(jax.random.fold_in(kx, batch), 2)
        x = jax.random.normal(kxb, (batch, input_size), dtype=jnp.float32)
        labels = jax.random.normal(kyb, (batch, output_size), dtype=jnp.float32)

        preds_ref = _forward_reference(x, params)
        loss_ref = _loss_reference(labels, preds_ref)

        # forward (module-parity (B, out, 2) output)
        preds = gaussian_history_forward(x, params)
        jax.block_until_ready(preds)
        assert preds.shape == (batch, output_size, 2), preds.shape
        assert jnp.allclose(preds, preds_ref, rtol=1e-4, atol=1e-4), (
            batch, float(jnp.max(jnp.abs(preds - preds_ref))))

        # standalone LikelihoodLossFunction
        loss = likelihood_loss(labels, preds)
        jax.block_until_ready(loss)
        assert jnp.allclose(loss, loss_ref, rtol=1e-4, atol=1e-4), (
            batch, float(loss), float(loss_ref))

        # fused forward + loss (no mu/logvar HBM round trip)
        slab, loss_f = gaussian_history_forward_and_loss(x, labels, params)
        jax.block_until_ready(loss_f)
        preds_f = jnp.stack([slab[:, :output_size], slab[:, output_size:]], axis=2)
        assert jnp.allclose(preds_f, preds_ref, rtol=1e-4, atol=1e-4), (
            batch, float(jnp.max(jnp.abs(preds_f - preds_ref))))
        assert jnp.allclose(loss_f, loss_ref, rtol=1e-4, atol=1e-4), (
            batch, float(loss_f), float(loss_ref))

    print("KERNEL_OK")
</pallas_src>

<mosaic_0001>
module attributes {stable_mosaic.version = 11 : i64} {
  func.func @_ghn_forward_kernel(%arg0: i32, %arg1: memref<8x32xf32, #tpu.memory_space<vmem>>, %arg2: memref<32x64xf32, #tpu.memory_space<vmem>>, %arg3: memref<1x64xf32, #tpu.memory_space<vmem>>, %arg4: memref<64x64xf32, #tpu.memory_space<vmem>>, %arg5: memref<1x64xf32, #tpu.memory_space<vmem>>, %arg6: memref<64x64xf32, #tpu.memory_space<vmem>>, %arg7: memref<1x64xf32, #tpu.memory_space<vmem>>, %arg8: memref<64x32xf32, #tpu.memory_space<vmem>>, %arg9: memref<1x32xf32, #tpu.memory_space<vmem>>, %arg10: memref<8x32xf32, #tpu.memory_space<vmem>>) attributes {dimension_semantics = [#tpu.dimension_semantics<parallel>], iteration_bounds = array<i64: 1>, scalar_prefetch = 0 : i64, scratch_operands = 0 : i64, tpu.core_type = #tpu.core_type<tc>, window_params = [{transform_indices = @transform_0, window_bounds = array<i64: 8, 32>}, {pipeline_mode = #tpu.pipeline_mode<synchronous>, transform_indices = @transform_1, window_bounds = array<i64: 32, 64>}, {pipeline_mode = #tpu.pipeline_mode<synchronous>, transform_indices = @transform_2, window_bounds = array<i64: 1, 64>}, {pipeline_mode = #tpu.pipeline_mode<synchronous>, transform_indices = @transform_3, window_bounds = array<i64: 64, 64>}, {pipeline_mode = #tpu.pipeline_mode<synchronous>, transform_indices = @transform_4, window_bounds = array<i64: 1, 64>}, {pipeline_mode = #tpu.pipeline_mode<synchronous>, transform_indices = @transform_5, window_bounds = array<i64: 64, 64>}, {pipeline_mode = #tpu.pipeline_mode<synchronous>, transform_indices = @transform_6, window_bounds = array<i64: 1, 64>}, {pipeline_mode = #tpu.pipeline_mode<synchronous>, transform_indices = @transform_7, window_bounds = array<i64: 64, 32>}, {pipeline_mode = #tpu.pipeline_mode<synchronous>, transform_indices = @transform_8, window_bounds = array<i64: 1, 32>}, {transform_indices = @transform_9, window_bounds = array<i64: 8, 32>}]} {
    %c0 = arith.constant 0 : index
    %c0_0 = arith.constant 0 : index
    %0 = vector.load %arg1[%c0, %c0_0] : memref<8x32xf32, #tpu.memory_space<vmem>>, vector<8x32xf32>
    %c0_1 = arith.constant 0 : index
    %c0_2 = arith.constant 0 : index
    %1 = vector.load %arg2[%c0_1, %c0_2] : memref<32x64xf32, #tpu.memory_space<vmem>>, vector<32x64xf32>
    %cst = arith.constant dense<0.000000e+00> : vector<8x64xf32>
    %2 = tpu.matmul %0, %1, %cst {dimension_numbers = #tpu.dot_dimension_numbers<[1], [0], [0], [1], [0, 0, 1, 1], [], []>} : vector<8x32xf32>, vector<32x64xf32>, vector<8x64xf32> -> vector<8x64xf32>
    %c0_3 = arith.constant 0 : index
    %c0_4 = arith.constant 0 : index
    %3 = vector.load %arg3[%c0_3, %c0_4] : memref<1x64xf32, #tpu.memory_space<vmem>>, vector<1x64xf32>
    %4 = vector.broadcast %3 : vector<1x64xf32> to vector<8x64xf32>
    %5 = arith.addf %2, %4 : vector<8x64xf32>
    %cst_5 = arith.constant 0.000000e+00 : f32
    %6 = vector.broadcast %cst_5 : f32 to vector<8x64xf32>
    %7 = arith.maximumf %5, %6 : vector<8x64xf32>
    %c0_6 = arith.constant 0 : index
    %c0_7 = arith.constant 0 : index
    %8 = vector.load %arg4[%c0_6, %c0_7] : memref<64x64xf32, #tpu.memory_space<vmem>>, vector<64x64xf32>
    %cst_8 = arith.constant dense<0.000000e+00> : vector<8x64xf32>
    %9 = tpu.matmul %7, %8, %cst_8 {dimension_numbers = #tpu.dot_dimension_numbers<[1], [0], [0], [1], [0, 0, 1, 1], [], []>} : vector<8x64xf32>, vector<64x64xf32>, vector<8x64xf32> -> vector<8x64xf32>
    %c0_9 = arith.constant 0 : index
    %c0_10 = arith.constant 0 : index
    %10 = vector.load %arg5[%c0_9, %c0_10] : memref<1x64xf32, #tpu.memory_space<vmem>>, vector<1x64xf32>
    %11 = vector.broadcast %10 : vector<1x64xf32> to vector<8x64xf32>
    %12 = arith.addf %9, %11 : vector<8x64xf32>
    %cst_11 = arith.constant 0.000000e+00 : f32
    %13 = vector.broadcast %cst_11 : f32 to vector<8x64xf32>
    %14 = arith.maximumf %12, %13 : vector<8x64xf32>
    %c0_12 = arith.constant 0 : index
    %c0_13 = arith.constant 0 : index
    %15 = vector.load %arg6[%c0_12, %c0_13] : memref<64x64xf32, #tpu.memory_space<vmem>>, vector<64x64xf32>
    %cst_14 = arith.constant dense<0.000000e+00> : vector<8x64xf32>
    %16 = tpu.matmul %14, %15, %cst_14 {dimension_numbers = #tpu.dot_dimension_numbers<[1], [0], [0], [1], [0, 0, 1, 1], [], []>} : vector<8x64xf32>, vector<64x64xf32>, vector<8x64xf32> -> vector<8x64xf32>
    %c0_15 = arith.constant 0 : index
    %c0_16 = arith.constant 0 : index
    %17 = vector.load %arg7[%c0_15, %c0_16] : memref<1x64xf32, #tpu.memory_space<vmem>>, vector<1x64xf32>
    %18 = vector.broadcast %17 : vector<1x64xf32> to vector<8x64xf32>
    %19 = arith.addf %16, %18 : vector<8x64xf32>
    %cst_17 = arith.constant 0.000000e+00 : f32
    %20 = vector.broadcast %cst_17 : f32 to vector<8x64xf32>
    %21 = arith.maximumf %19, %20 : vector<8x64xf32>
    %c0_18 = arith.constant 0 : index
    %c0_19 = arith.constant 0 : index
    %22 = vector.load %arg8[%c0_18, %c0_19] : memref<64x32xf32, #tpu.memory_space<vmem>>, vector<64x32xf32>
    %cst_20 = arith.constant dense<0.000000e+00> : vector<8x32xf32>
    %23 = tpu.matmul %21, %22, %cst_20 {dimension_numbers = #tpu.dot_dimension_numbers<[1], [0], [0], [1], [0, 0, 1, 1], [], []>} : vector<8x64xf32>, vector<64x32xf32>, vector<8x32xf32> -> vector<8x32xf32>
    %c0_21 = arith.constant 0 : index
    %c0_22 = arith.constant 0 : index
    %24 = vector.load %arg9[%c0_21, %c0_22] : memref<1x32xf32, #tpu.memory_space<vmem>>, vector<1x32xf32>
    %25 = vector.broadcast %24 : vector<1x32xf32> to vector<8x32xf32>
    %26 = arith.addf %23, %25 : vector<8x32xf32>
    %c0_23 = arith.constant 0 : index
    %c0_24 = arith.constant 0 : index
    %27 = vector.load %arg10[%c0_23, %c0_24] : memref<8x32xf32, #tpu.memory_space<vmem>>, vector<8x32xf32>
    tpu.vector_store %arg10[%c0_23, %c0_24], %26 {strides = array<i32>} : memref<8x32xf32, #tpu.memory_space<vmem>>, vector<8x32xf32>,
    return
  }
  func.func @transform_0(%arg0: i32) -> (i32, i32) {
    %c0_i32 = arith.constant 0 : i32
    %c0_i32_0 = arith.constant 0 : i32
    return %arg0, %c0_i32 : i32, i32
  }
  func.func @transform_1(%arg0: i32) -> (i32, i32) {
    %c0_i32 = arith.constant 0 : i32
    %c0_i32_0 = arith.constant 0 : i32
    %c0_i32_1 = arith.constant 0 : i32
    return %c0_i32, %c0_i32_0 : i32, i32
  }
  func.func @transform_2(%arg0: i32) -> (i32, i32) {
    %c0_i32 = arith.constant 0 : i32
    %c0_i32_0 = arith.constant 0 : i32
    %c0_i32_1 = arith.constant 0 : i32
    return %c0_i32, %c0_i32_0 : i32, i32
  }
  func.func @transform_3(%arg0: i32) -> (i32, i32) {
    %c0_i32 = arith.constant 0 : i32
    %c0_i32_0 = arith.constant 0 : i32
    %c0_i32_1 = arith.constant 0 : i32
    return %c0_i32, %c0_i32_0 : i32, i32
  }
  func.func @transform_4(%arg0: i32) -> (i32, i32) {
    %c0_i32 = arith.constant 0 : i32
    %c0_i32_0 = arith.constant 0 : i32
    %c0_i32_1 = arith.constant 0 : i32
    return %c0_i32, %c0_i32_0 : i32, i32
  }
  func.func @transform_5(%arg0: i32) -> (i32, i32) {
    %c0_i32 = arith.constant 0 : i32
    %c0_i32_0 = arith.constant 0 : i32
    %c0_i32_1 = arith.constant 0 : i32
    return %c0_i32, %c0_i32_0 : i32, i32
  }
  func.func @transform_6(%arg0: i32) -> (i32, i32) {
    %c0_i32 = arith.constant 0 : i32
    %c0_i32_0 = arith.constant 0 : i32
    %c0_i32_1 = arith.constant 0 : i32
    return %c0_i32, %c0_i32_0 : i32, i32
  }
  func.func @transform_7(%arg0: i32) -> (i32, i32) {
    %c0_i32 = arith.constant 0 : i32
    %c0_i32_0 = arith.constant 0 : i32
    %c0_i32_1 = arith.constant 0 : i32
    return %c0_i32, %c0_i32_0 : i32, i32
  }
  func.func @transform_8(%arg0: i32) -> (i32, i32) {
    %c0_i32 = arith.constant 0 : i32
    %c0_i32_0 = arith.constant 0 : i32
    %c0_i32_1 = arith.constant 0 : i32
    return %c0_i32, %c0_i32_0 : i32, i32
  }
  func.func @transform_9(%arg0: i32) -> (i32, i32) {
    %c0_i32 = arith.constant 0 : i32
    %c0_i32_0 = arith.constant 0 : i32
    return %arg0, %c0_i32 : i32, i32
  }
}

</mosaic_0001>

<llo_original>
// kernel: tpu_custom_call.1
$region0: #{tpu_custom_call.1}
  #allocation0 [shape = 'u32[]', space=smem, size = 0x4, offset = 0x4, fixed_abs, tag = 'smem constant byte address 0x4 - core index']
  #allocation1 [shape = 'u32[144,128]{1,0:T(1,128)}', space=vmem, size = 0x12000, scoped, tag = 'internal scratch']
  %s0 = inlined_call_operand.hbm [shape: f32[8,32], index: 0, kind: input, shape index: {}]
  %s1 = inlined_call_operand.vmem [shape: f32[32,64], index: 1, kind: input, shape index: {}]
  %s2 = inlined_call_operand.vmem [shape: f32[1,64], index: 2, kind: input, shape index: {}]
  %s3 = inlined_call_operand.vmem [shape: f32[64,64], index: 3, kind: input, shape index: {}]
  %s4 = inlined_call_operand.vmem [shape: f32[1,64], index: 4, kind: input, shape index: {}]
  %s5 = inlined_call_operand.hbm [shape: f32[64,64], index: 5, kind: input, shape index: {}]
  %s6 = inlined_call_operand.vmem [shape: f32[1,64], index: 6, kind: input, shape index: {}]
  %s7 = inlined_call_operand.vmem [shape: f32[64,32], index: 7, kind: input, shape index: {}]
  %s8 = inlined_call_operand.vmem [shape: f32[1,32], index: 8, kind: input, shape index: {}]
  %s9 = inlined_call_operand.hbm [shape: f32[8,32], index: 9, kind: output, shape index: {}]
  %s10 = sld [smem:[#allocation0]]
  $region54: #{tpu_custom_call.1} parent=0
    _
  %s12 = ssub.s32 1, %s10
  %s13 = scalar_select 0, %s12, %s10
  $region1: #{tpu_custom_call.1} parent=0
    #allocation2 [shape = 'u8[4096]{0}', space=vmem, size = 0x1000, scoped, tag = 'input window, operand 0, single buffered']
    #allocation3 [shape = 's32[1]{0}', space=sflag, size = 0x4, scoped, tag = 'scoped memory for tpu_custom_call.1']
    #allocation4 [shape = 's32[1]{0}', space=sflag, size = 0x4, scoped, tag = 'scoped memory for tpu_custom_call.1']
    #allocation5 [shape = 'u8[32768]{0}', space=vmem, size = 0x8000, scoped, tag = 'input window, operand 5, single buffered']
    #allocation6 [shape = 's32[1]{0}', space=sflag, size = 0x4, scoped, tag = 'scoped memory for tpu_custom_call.1']
    #allocation7 [shape = 'u8[4096]{0}', space=vmem, size = 0x1000, scoped, tag = 'output window, operand 0, single buffered']
    %14 = vsyncpa [#allocation3], 0
    %15 = vsyncpa [#allocation6], 0
    %16 = vsyncpa [#allocation4], 0
    // Predicated region
    $region2: #{tpu_custom_call.1} parent=1 // pred_check
      _
    $region3: #{tpu_custom_call.1} parent=1 // pred_check_branch
      %18 = sbr.rel (0) target = $region5
    $region4: #{tpu_custom_call.1} parent=1 // pred_region
      %s20 = ssub.s32 128, 128
      %21 = vsyncadd [#allocation3], %s20
      %s23 = sshll.u32 [#allocation2], 4
      %s24 = int_to_ptr.vmem [resolvable:$true] %s23
      %26 = dma.hbm_to_vmem [thread:$0]  %s0, 128, %s24, [#allocation3]
    $region5: #{tpu_custom_call.1} parent=1 // pred_fallthru
      _
    // Predicated region
    $region6: #{tpu_custom_call.1} parent=1 // pred_check
      _
    $region7: #{tpu_custom_call.1} parent=1 // pred_check_branch
      %28 = sbr.rel (0) target = $region9
    $region8: #{tpu_custom_call.1} parent=1 // pred_region
      _
    $region9: #{tpu_custom_call.1} parent=1 // pred_fallthru
      _
    // Predicated region
    $region10: #{tpu_custom_call.1} parent=1 // pred_check
      _
    $region11: #{tpu_custom_call.1} parent=1 // pred_check_branch
      %30 = sbr.rel (0) target = $region13
    $region12: #{tpu_custom_call.1} parent=1 // pred_region
      _
    $region13: #{tpu_custom_call.1} parent=1 // pred_fallthru
      _
    // Predicated region
    $region14: #{tpu_custom_call.1} parent=1 // pred_check
      _
    $region15: #{tpu_custom_call.1} parent=1 // pred_check_branch
      %32 = sbr.rel (0) target = $region17
    $region16: #{tpu_custom_call.1} parent=1 // pred_region
      _
    $region17: #{tpu_custom_call.1} parent=1 // pred_fallthru
      _
    // Predicated region
    $region18: #{tpu_custom_call.1} parent=1 // pred_check
      _
    $region19: #{tpu_custom_call.1} parent=1 // pred_check_branch
      %34 = sbr.rel (0) target = $region21
    $region20: #{tpu_custom_call.1} parent=1 // pred_region
      _
    $region21: #{tpu_custom_call.1} parent=1 // pred_fallthru
      _
    // Predicated region
    $region22: #{tpu_custom_call.1} parent=1 // pred_check
      _
    $region23: #{tpu_custom_call.1} parent=1 // pred_check_branch
      %36 = sbr.rel (0) target = $region25
    $region24: #{tpu_custom_call.1} parent=1 // pred_region
      %s38 = ssub.s32 1024, 1024
      %39 = vsyncadd [#allocation6], %s38
      %s40 = sshll.u32 [#allocation5], 4
      %s41 = int_to_ptr.vmem [resolvable:$true] %s40
      %46 = dma.hbm_to_vmem [thread:$0]  %s5, 1024, %s41, [#allocation6], 128, 128, 8
    $region25: #{tpu_custom_call.1} parent=1 // pred_fallthru
      _
    // Predicated region
    $region26: #{tpu_custom_call.1} parent=1 // pred_check
      _
    $region27: #{tpu_custom_call.1} parent=1 // pred_check_branch
      %48 = sbr.rel (0) target = $region29
    $region28: #{tpu_custom_call.1} parent=1 // pred_region
      _
    $region29: #{tpu_custom_call.1} parent=1 // pred_fallthru
      _
    // Predicated region
    $region30: #{tpu_custom_call.1} parent=1 // pred_check
      _
    $region31: #{tpu_custom_call.1} parent=1 // pred_check_branch
      %50 = sbr.rel (0) target = $region33
    $region32: #{tpu_custom_call.1} parent=1 // pred_region
      _
    $region33: #{tpu_custom_call.1} parent=1 // pred_fallthru
      _
    // Predicated region
    $region34: #{tpu_custom_call.1} parent=1 // pred_check
      _
    $region35: #{tpu_custom_call.1} parent=1 // pred_check_branch
      %52 = sbr.rel (0) target = $region37
    $region36: #{tpu_custom_call.1} parent=1 // pred_region
      _
    $region37: #{tpu_custom_call.1} parent=1 // pred_fallthru
      _
    // Predicated region
    $region38: #{tpu_custom_call.1} parent=1 // pred_check
      _
    $region39: #{tpu_custom_call.1} parent=1 // pred_check_branch
      %54 = sbr.rel (0) target = $region41
    $region40: #{tpu_custom_call.1} parent=1 // pred_region
      %55 = dma.done [#allocation3], 128
    $region41: #{tpu_custom_call.1} parent=1 // pred_fallthru
      _
    // Predicated region
    $region42: #{tpu_custom_call.1} parent=1 // pred_check
      _
    $region43: #{tpu_custom_call.1} parent=1 // pred_check_branch
      %57 = sbr.rel (0) target = $region45
    $region44: #{tpu_custom_call.1} parent=1 // pred_region
      %58 = dma.done [#allocation6], 1024
    $region45: #{tpu_custom_call.1} parent=1 // pred_fallthru
      _
    %v59 = vld [vmem:[#allocation2] sm:$0xff]
    %v60 = vld [vmem:[%s1] sm:$0xff]
    %v61 = vld [vmem:[%s1 + $0x8] sm:$0xff]
    %v62 = vld [vmem:[%s1 + $0x10] sm:$0xff]
    %v63 = vld [vmem:[%s1 + $0x18] sm:$0xff]
    %v64 = vld [vmem:[%s2] sm:$0x1]
    %v66 = vlaneseq
    %v67 = vshrl.u32 %v66, 7
    %v68 = vsub.s32 0, %v67
    %v69 = vrot.slane %v64, %v68
    %vm71 = vcmask 261120
    %v73 = vsel %vm71, %v59, 0
    %75 = vmatprep.subr.mxu0 0.0
    %76 = vmatpush1.msra.mxu0 0.0
    %77 = vmatprep.subr.mxu0 0.0
    %78 = vmatpush1.msra.mxu0 0.0
    %79 = vmatprep.subr.mxu0 0.0
    %80 = vmatpush1.msra.mxu0 0.0
    %81 = vmatprep.subr.mxu0 0.0
    %82 = vmatpush1.msra.mxu0 0.0
    %83 = vmatprep.subr.mxu0 0.0
    %84 = vmatpush1.msra.mxu0 0.0
    %85 = vmatprep.subr.mxu0 0.0
    %86 = vmatpush1.msra.mxu0 0.0
    %87 = vmatprep.subr.mxu0 0.0
    %88 = vmatpush1.msra.mxu0 0.0
    %89 = vmatprep.subr.mxu0 0.0
    %90 = vmatpush1.msra.mxu0 0.0
    %91 = vmatprep.subr.mxu0 0.0
    %92 = vmatpush1.msra.mxu0 0.0
    %93 = vmatprep.subr.mxu0 0.0
    %94 = vmatpush1.msra.mxu0 0.0
    %95 = vmatprep.subr.mxu0 0.0
    %96 = vmatpush1.msra.mxu0 0.0
    %97 = vmatprep.subr.mxu0 0.0
    %98 = vmatpush1.msra.mxu0 0.0
    %99 = vmatprep.subr.mxu0 0.0
    %100 = vmatpush1.msra.mxu0 %v63
    %101 = vmatprep.subr.mxu0 0.0
    %102 = vmatpush1.msra.mxu0 %v62
    %103 = vmatprep.subr.mxu0 0.0
    %104 = vmatpush1.msra.mxu0 %v61
    %105 = vmatprep.subr.mxu0 0.0
    %106 = vmatpush1.msra.mxu0 %v60
    %107 = vmatprep.subr.mxu0 0.0
    %108 = vmatpush2.msra.mxu0 0.0
    %109 = vmatprep.subr.mxu0 0.0
    %110 = vmatpush2.msra.mxu0 0.0
    %111 = vmatprep.subr.mxu0 0.0
    %112 = vmatpush2.msra.mxu0 0.0
    %113 = vmatprep.subr.mxu0 0.0
    %114 = vmatpush2.msra.mxu0 0.0
    %115 = vmatprep.subr.mxu0 0.0
    %116 = vmatpush2.msra.mxu0 0.0
    %117 = vmatprep.subr.mxu0 0.0
    %118 = vmatpush2.msra.mxu0 0.0
    %119 = vmatprep.subr.mxu0 0.0
    %120 = vmatpush2.msra.mxu0 0.0
    %121 = vmatprep.subr.mxu0 0.0
    %122 = vmatpush2.msra.mxu0 0.0
    %123 = vmatprep.subr.mxu0 0.0
    %124 = vmatpush2.msra.mxu0 0.0
    %125 = vmatprep.subr.mxu0 0.0
    %126 = vmatpush2.msra.mxu0 0.0
    %127 = vmatprep.subr.mxu0 0.0
    %128 = vmatpush2.msra.mxu0 0.0
    %129 = vmatprep.subr.mxu0 0.0
    %130 = vmatpush2.msra.mxu0 0.0
    %131 = vmatprep.subr.mxu0 0.0
    %132 = vmatpush2.msra.mxu0 0.0
    %133 = vmatprep.subr.mxu0 0.0
    %134 = vmatpush2.msra.mxu0 0.0
    %135 = vmatprep.subr.mxu0 0.0
    %136 = vmatpush2.msra.mxu0 0.0
    %137 = vmatprep.subr.mxu0 0.0
    %138 = vmatpush2.msra.mxu0 0.0
    %139 = vmatprep.mubr.f32.mxu0 0.0
    %140 = vmatmul.mubr.f32.gmra.mxu0 %v73
    %v141 = vpop.f32.mrf.mxu0
    %v142 = vadd.f32 %v69, %v141
    %v143 = vpop.f32.mrf.mxu0
    %144 = vdwg.mxu0
    %v145 = vmax.f32 %v142, 0.0
    %v146 = vld [vmem:[%s3] sm:$0xff]
    %v147 = vld [vmem:[%s3 + $0x8] sm:$0xff]
    %v148 = vld [vmem:[%s3 + $0x10] sm:$0xff]
    %v149 = vld [vmem:[%s3 + $0x18] sm:$0xff]
    %v150 = vld [vmem:[%s3 + $0x20] sm:$0xff]
    %v151 = vld [vmem:[%s3 + $0x28] sm:$0xff]
    %v152 = vld [vmem:[%s3 + $0x30] sm:$0xff]
    %v153 = vld [vmem:[%s3 + $0x38] sm:$0xff]
    %v154 = vld [vmem:[%s4] sm:$0x1]
    %v156 = vlaneseq
    %v157 = vshrl.u32 %v156, 7
    %v158 = vsub.s32 0, %v157
    %v159 = vrot.slane %v154, %v158
    %vm161 = vcmask 523264
    %v163 = vsel %vm161, %v145, 0
    %165 = vmatprep.subr.mxu0 0.0
    %166 = vmatpush1.msra.mxu0 0.0
    %167 = vmatprep.subr.mxu0 0.0
    %168 = vmatpush1.msra.mxu0 0.0
    %169 = vmatprep.subr.mxu0 0.0
    %170 = vmatpush1.msra.mxu0 0.0
    %171 = vmatprep.subr.mxu0 0.0
    %172 = vmatpush1.msra.mxu0 0.0
    %173 = vmatprep.subr.mxu0 0.0
    %174 = vmatpush1.msra.mxu0 0.0
    %175 = vmatprep.subr.mxu0 0.0
    %176 = vmatpush1.msra.mxu0 0.0
    %177 = vmatprep.subr.mxu0 0.0
    %178 = vmatpush1.msra.mxu0 0.0
    %179 = vmatprep.subr.mxu0 0.0
    %180 = vmatpush1.msra.mxu0 0.0
    %181 = vmatprep.subr.mxu0 0.0
    %182 = vmatpush1.msra.mxu0 %v153
    %183 = vmatprep.subr.mxu0 0.0
    %184 = vmatpush1.msra.mxu0 %v152
    %185 = vmatprep.subr.mxu0 0.0
    %186 = vmatpush1.msra.mxu0 %v151
    %187 = vmatprep.subr.mxu0 0.0
    %188 = vmatpush1.msra.mxu0 %v150
    %189 = vmatprep.subr.mxu0 0.0
    %190 = vmatpush1.msra.mxu0 %v149
    %191 = vmatprep.subr.mxu0 0.0
    %192 = vmatpush1.msra.mxu0 %v148
    %193 = vmatprep.subr.mxu0 0.0
    %194 = vmatpush1.msra.mxu0 %v147
    %195 = vmatprep.subr.mxu0 0.0
    %196 = vmatpush1.msra.mxu0 %v146
    %197 = vmatprep.subr.mxu0 0.0
    %198 = vmatpush2.msra.mxu0 0.0
    %199 = vmatprep.subr.mxu0 0.0
    %200 = vmatpush2.msra.mxu0 0.0
    %201 = vmatprep.subr.mxu0 0.0
    %202 = vmatpush2.msra.mxu0 0.0
    %203 = vmatprep.subr.mxu0 0.0
    %204 = vmatpush2.msra.mxu0 0.0
    %205 = vmatprep.subr.mxu0 0.0
    %206 = vmatpush2.msra.mxu0 0.0
    %207 = vmatprep.subr.mxu0 0.0
    %208 = vmatpush2.msra.mxu0 0.0
    %209 = vmatprep.subr.mxu0 0.0
    %210 = vmatpush2.msra.mxu0 0.0
    %211 = vmatprep.subr.mxu0 0.0
    %212 = vmatpush2.msra.mxu0 0.0
    %213 = vmatprep.subr.mxu0 0.0
    %214 = vmatpush2.msra.mxu0 0.0
    %215 = vmatprep.subr.mxu0 0.0
    %216 = vmatpush2.msra.mxu0 0.0
    %217 = vmatprep.subr.mxu0 0.0
    %218 = vmatpush2.msra.mxu0 0.0
    %219 = vmatprep.subr.mxu0 0.0
    %220 = vmatpush2.msra.mxu0 0.0
    %221 = vmatprep.subr.mxu0 0.0
    %222 = vmatpush2.msra.mxu0 0.0
    %223 = vmatprep.subr.mxu0 0.0
    %224 = vmatpush2.msra.mxu0 0.0
    %225 = vmatprep.subr.mxu0 0.0
    %226 = vmatpush2.msra.mxu0 0.0
    %227 = vmatprep.subr.mxu0 0.0
    %228 = vmatpush2.msra.mxu0 0.0
    %229 = vmatprep.mubr.f32.mxu0 0.0
    %230 = vmatmul.mubr.f32.gmra.mxu0 %v163
    %v231 = vpop.f32.mrf.mxu0
    %v232 = vadd.f32 %v159, %v231
    %v233 = vpop.f32.mrf.mxu0
    %234 = vdwg.mxu0
    %v235 = vmax.f32 %v232, 0.0
    %v236 = vld [vmem:[#allocation5] sm:$0xff]
    %v237 = vld [vmem:[#allocation5 + $0x8] sm:$0xff]
    %v238 = vld [vmem:[#allocation5 + $0x10] sm:$0xff]
    %v239 = vld [vmem:[#allocation5 + $0x18] sm:$0xff]
    %v240 = vld [vmem:[#allocation5 + $0x20] sm:$0xff]
    %v241 = vld [vmem:[#allocation5 + $0x28] sm:$0xff]
    %v242 = vld [vmem:[#allocation5 + $0x30] sm:$0xff]
    %v243 = vld [vmem:[#allocation5 + $0x38] sm:$0xff]
    %v244 = vld [vmem:[%s6] sm:$0x1]
    %v246 = vlaneseq
    %v247 = vshrl.u32 %v246, 7
    %v248 = vsub.s32 0, %v247
    %v249 = vrot.slane %v244, %v248
    %v252 = vsel %vm161, %v235, 0
    %254 = vmatprep.subr.mxu0 0.0
    %255 = vmatpush1.msra.mxu0 0.0
    %256 = vmatprep.subr.mxu0 0.0
    %257 = vmatpush1.msra.mxu0 0.0
    %258 = vmatprep.subr.mxu0 0.0
    %259 = vmatpush1.msra.mxu0 0.0
    %260 = vmatprep.subr.mxu0 0.0
    %261 = vmatpush1.msra.mxu0 0.0
    %262 = vmatprep.subr.mxu0 0.0
    %263 = vmatpush1.msra.mxu0 0.0
    %264 = vmatprep.subr.mxu0 0.0
    %265 = vmatpush1.msra.mxu0 0.0
    %266 = vmatprep.subr.mxu0 0.0
    %267 = vmatpush1.msra.mxu0 0.0
    %268 = vmatprep.subr.mxu0 0.0
    %269 = vmatpush1.msra.mxu0 0.0
    %270 = vmatprep.subr.mxu0 0.0
    %271 = vmatpush1.msra.mxu0 %v243
    %272 = vmatprep.subr.mxu0 0.0
    %273 = vmatpush1.msra.mxu0 %v242
    %274 = vmatprep.subr.mxu0 0.0
    %275 = vmatpush1.msra.mxu0 %v241
    %276 = vmatprep.subr.mxu0 0.0
    %277 = vmatpush1.msra.mxu0 %v240
    %278 = vmatprep.subr.mxu0 0.0
    %279 = vmatpush1.msra.mxu0 %v239
    %280 = vmatprep.subr.mxu0 0.0
    %281 = vmatpush1.msra.mxu0 %v238
    %282 = vmatprep.subr.mxu0 0.0
    %283 = vmatpush1.msra.mxu0 %v237
    %284 = vmatprep.subr.mxu0 0.0
    %285 = vmatpush1.msra.mxu0 %v236
    %286 = vmatprep.subr.mxu0 0.0
    %287 = vmatpush2.msra.mxu0 0.0
    %288 = vmatprep.subr.mxu0 0.0
    %289 = vmatpush2.msra.mxu0 0.0
    %290 = vmatprep.subr.mxu0 0.0
    %291 = vmatpush2.msra.mxu0 0.0
    %292 = vmatprep.subr.mxu0 0.0
    %293 = vmatpush2.msra.mxu0 0.0
    %294 = vmatprep.subr.mxu0 0.0
    %295 = vmatpush2.msra.mxu0 0.0
    %296 = vmatprep.subr.mxu0 0.0
    %297 = vmatpush2.msra.mxu0 0.0
    %298 = vmatprep.subr.mxu0 0.0
    %299 = vmatpush2.msra.mxu0 0.0
    %300 = vmatprep.subr.mxu0 0.0
    %301 = vmatpush2.msra.mxu0 0.0
    %302 = vmatprep.subr.mxu0 0.0
    %303 = vmatpush2.msra.mxu0 0.0
    %304 = vmatprep.subr.mxu0 0.0
    %305 = vmatpush2.msra.mxu0 0.0
    %306 = vmatprep.subr.mxu0 0.0
    %307 = vmatpush2.msra.mxu0 0.0
    %308 = vmatprep.subr.mxu0 0.0
    %309 = vmatpush2.msra.mxu0 0.0
    %310 = vmatprep.subr.mxu0 0.0
    %311 = vmatpush2.msra.mxu0 0.0
    %312 = vmatprep.subr.mxu0 0.0
    %313 = vmatpush2.msra.mxu0 0.0
    %314 = vmatprep.subr.mxu0 0.0
    %315 = vmatpush2.msra.mxu0 0.0
    %316 = vmatprep.subr.mxu0 0.0
    %317 = vmatpush2.msra.mxu0 0.0
    %318 = vmatprep.mubr.f32.mxu0 0.0
    %319 = vmatmul.mubr.f32.gmra.mxu0 %v252
    %v320 = vpop.f32.mrf.mxu0
    %v321 = vadd.f32 %v249, %v320
    %v322 = vpop.f32.mrf.mxu0
    %323 = vdwg.mxu0
    %v324 = vmax.f32 %v321, 0.0
    %v325 = vld [vmem:[%s7] sm:$0xff]
    %v326 = vld [vmem:[%s7 + $0x8] sm:$0xff]
    %v327 = vld [vmem:[%s7 + $0x10] sm:$0xff]
    %v328 = vld [vmem:[%s7 + $0x18] sm:$0xff]
    %v329 = vld [vmem:[%s7 + $0x20] sm:$0xff]
    %v330 = vld [vmem:[%s7 + $0x28] sm:$0xff]
    %v331 = vld [vmem:[%s7 + $0x30] sm:$0xff]
    %v332 = vld [vmem:[%s7 + $0x38] sm:$0xff]
    %v333 = vld [vmem:[%s8] sm:$0x1]
    %v335 = vlaneseq
    %v336 = vshrl.u32 %v335, 7
    %v337 = vsub.s32 0, %v336
    %v338 = vrot.slane %v333, %v337
    %v341 = vsel %vm161, %v324, 0
    %343 = vmatprep.subr.mxu0 0.0
    %344 = vmatpush1.msra.mxu0 0.0
    %345 = vmatprep.subr.mxu0 0.0
    %346 = vmatpush1.msra.mxu0 0.0
    %347 = vmatprep.subr.mxu0 0.0
    %348 = vmatpush1.msra.mxu0 0.0
    %349 = vmatprep.subr.mxu0 0.0
    %350 = vmatpush1.msra.mxu0 0.0
    %351 = vmatprep.subr.mxu0 0.0
    %352 = vmatpush1.msra.mxu0 0.0
    %353 = vmatprep.subr.mxu0 0.0
    %354 = vmatpush1.msra.mxu0 0.0
    %355 = vmatprep.subr.mxu0 0.0
    %356 = vmatpush1.msra.mxu0 0.0
    %357 = vmatprep.subr.mxu0 0.0
    %358 = vmatpush1.msra.mxu0 0.0
    %359 = vmatprep.subr.mxu0 0.0
    %360 = vmatpush1.msra.mxu0 %v332
    %361 = vmatprep.subr.mxu0 0.0
    %362 = vmatpush1.msra.mxu0 %v331
    %363 = vmatprep.subr.mxu0 0.0
    %364 = vmatpush1.msra.mxu0 %v330
    %365 = vmatprep.subr.mxu0 0.0
    %366 = vmatpush1.msra.mxu0 %v329
    %367 = vmatprep.subr.mxu0 0.0
    %368 = vmatpush1.msra.mxu0 %v328
    %369 = vmatprep.subr.mxu0 0.0
    %370 = vmatpush1.msra.mxu0 %v327
    %371 = vmatprep.subr.mxu0 0.0
    %372 = vmatpush1.msra.mxu0 %v326
    %373 = vmatprep.subr.mxu0 0.0
    %374 = vmatpush1.msra.mxu0 %v325
    %375 = vmatprep.subr.mxu0 0.0
    %376 = vmatpush2.msra.mxu0 0.0
    %377 = vmatprep.subr.mxu0 0.0
    %378 = vmatpush2.msra.mxu0 0.0
    %379 = vmatprep.subr.mxu0 0.0
    %380 = vmatpush2.msra.mxu0 0.0
    %381 = vmatprep.subr.mxu0 0.0
    %382 = vmatpush2.msra.mxu0 0.0
    %383 = vmatprep.subr.mxu0 0.0
    %384 = vmatpush2.msra.mxu0 0.0
    %385 = vmatprep.subr.mxu0 0.0
    %386 = vmatpush2.msra.mxu0 0.0
    %387 = vmatprep.subr.mxu0 0.0
    %388 = vmatpush2.msra.mxu0 0.0
    %389 = vmatprep.subr.mxu0 0.0
    %390 = vmatpush2.msra.mxu0 0.0
    %391 = vmatprep.subr.mxu0 0.0
    %392 = vmatpush2.msra.mxu0 0.0
    %393 = vmatprep.subr.mxu0 0.0
    %394 = vmatpush2.msra.mxu0 0.0
    %395 = vmatprep.subr.mxu0 0.0
    %396 = vmatpush2.msra.mxu0 0.0
    %397 = vmatprep.subr.mxu0 0.0
    %398 = vmatpush2.msra.mxu0 0.0
    %399 = vmatprep.subr.mxu0 0.0
    %400 = vmatpush2.msra.mxu0 0.0
    %401 = vmatprep.subr.mxu0 0.0
    %402 = vmatpush2.msra.mxu0 0.0
    %403 = vmatprep.subr.mxu0 0.0
    %404 = vmatpush2.msra.mxu0 0.0
    %405 = vmatprep.subr.mxu0 0.0
    %406 = vmatpush2.msra.mxu0 0.0
    %407 = vmatprep.mubr.f32.mxu0 0.0
    %408 = vmatmul.mubr.f32.gmra.mxu0 %v341
    %v409 = vpop.f32.mrf.mxu0
    %v410 = vadd.f32 %v338, %v409
    %v411 = vpop.f32.mrf.mxu0
    %412 = vdwg.mxu0
    %413 = vst.msk [vmem:[#allocation7] sm:$0xff] %vm71, %v410
    // Predicated region
    $region46: #{tpu_custom_call.1} parent=1 // pred_check
      _
    $region47: #{tpu_custom_call.1} parent=1 // pred_check_branch
      %415 = sbr.rel (0) target = $region49
    $region48: #{tpu_custom_call.1} parent=1 // pred_region
      %s417 = ssub.s32 128, 128
      %418 = vsyncadd [#allocation4], %s417
      %s420 = sshll.u32 [#allocation7], 4
      %s421 = int_to_ptr.vmem [resolvable:$true] %s420
      %423 = dma.vmem_to_hbm [thread:$0]  %s421, 128, %s9, [#allocation4]
    $region49: #{tpu_custom_call.1} parent=1 // pred_fallthru
      _
    // Predicated region
    $region50: #{tpu_custom_call.1} parent=1 // pred_check
      _
    $region51: #{tpu_custom_call.1} parent=1 // pred_check_branch
      %425 = sbr.rel (0) target = $region53
    $region52: #{tpu_custom_call.1} parent=1 // pred_region
      %426 = dma.done [#allocation4], 128
    $region53: #{tpu_custom_call.1} parent=1 // pred_fallthru
      _
    %427 = vsyncpa [#allocation3], 1
    %428 = vsyncpa [#allocation6], 1
    %429 = vsyncpa [#allocation4], 1

</llo_original>
